<compile_context>
chip_gen: v7x
topology: tpu7x:2x2x1
jax: 0.10.0
libtpu: 0.0.40
codegen_flags: <defaults>
</compile_context>

<pallas_src>
import jax
import jax.numpy as jnp
import numpy as np
from jax.experimental import pallas as pl
from jax.experimental.pallas import tpu as pltpu


_INV_SQRT2 = 0.7071067811865476


def _erf(z):
    """Abramowitz & Stegun 7.1.26 rational approximation of erf (|err| < 1.5e-7).

    Uses only abs / mul / add / div / exp / select, which all lower cleanly in
    Mosaic, and matches torch.nn.GELU()'s exact-erf formulation to ~1e-7.
    """
    a1, a2, a3 = 0.254829592, -0.284496736, 1.421413741
    a4, a5, p = -1.453152027, 1.061405429, 0.3275911
    az = jnp.abs(z)
    t = 1.0 / (1.0 + p * az)
    poly = ((((a5 * t + a4) * t + a3) * t + a2) * t + a1) * t
    e = 1.0 - poly * jnp.exp(-az * az)
    return jnp.where(z < 0.0, -e, e)


def _gelu(h):
    # torch.nn.GELU() default ("exact"): 0.5 * x * (1 + erf(x / sqrt(2)))
    return 0.5 * h * (1.0 + _erf(h * _INV_SQRT2))


def _ffn_kernel(x_ref, w1_ref, b1_ref, w2_ref, b2_ref, o_ref, acc_ref):
    # x_ref  : (TM, dim)      row tile of the flattened input (reused across j)
    # w1_ref : (dim, TH)      hidden-column block of W1^T
    # b1_ref : (1, TH)        matching bias block
    # w2_ref : (TH, dim)      matching hidden-row block of W2^T
    # b2_ref : (1, dim)
    # o_ref  : (TM, dim)      output row tile (written on the last hidden step)
    # acc_ref: (TM, dim) f32  VMEM accumulator, resident across the hidden axis
    j = pl.program_id(1)

    @pl.when(j == 0)
    def _init():
        acc_ref[...] = jnp.zeros_like(acc_ref)

    # First projection (this hidden block only) + bias, f32 accumulation on MXU.
    h = jnp.dot(x_ref[...], w1_ref[...], preferred_element_type=jnp.float32)
    h = h + b1_ref[...].astype(jnp.float32)

    # GELU in f32 (keep the transcendental path in f32 — mandatory on v5e).
    h = _gelu(h)

    # Second projection: accumulate this hidden block's contribution into the
    # resident output tile.  Cast back to the weight dtype so bf16 weights run
    # the MXU at bf16 while accumulation stays f32.
    acc_ref[...] += jnp.dot(h.astype(w2_ref.dtype), w2_ref[...],
                            preferred_element_type=jnp.float32)

    @pl.when(j == pl.num_programs(1) - 1)
    def _finalize():
        o_ref[...] = (acc_ref[...] + b2_ref[...].astype(jnp.float32)).astype(o_ref.dtype)

    # TODO(synk): dropout with p > 0 (would need pltpu.prng_*) is not
    # implemented; the module is instantiated with dropout=0.0 => identity.


def feedforward_forward(x, w1_t, b1, w2_t, b2, *, block_m=256, block_h=512):
    """Fused MLP forward.

    x    : (..., dim)
    w1_t : (dim, hidden)  first Linear weight, PRE-transposed (y = x @ W1^T)
    b1   : (hidden,)
    w2_t : (hidden, dim)  second Linear weight, PRE-transposed
    b2   : (dim,)
    """
    assert block_m % 8 == 0 and block_h % 128 == 0
    orig_shape = x.shape
    dim = orig_shape[-1]
    hidden = w1_t.shape[1]
    assert w1_t.shape == (dim, hidden) and w2_t.shape == (hidden, dim)

    # Flatten leading dims: a lane-dense (rows, dim) slab whose row axis can be
    # tiled and sharded across TensorCores.
    x2 = x.reshape(-1, dim)
    m = x2.shape[0]

    # Row tile: multiple of 8 sublanes, capped at block_m; pad rows if needed.
    m8 = ((m + 7) // 8) * 8
    tm = min(block_m, m8)
    m_pad = ((m8 + tm - 1) // tm) * tm
    if m_pad != m:
        x2 = jnp.pad(x2, ((0, m_pad - m), (0, 0)))

    # Hidden tile: a multiple of 128 lanes dividing `hidden`, capped at block_h.
    # This bounds per-step VMEM (important on v7x's 64 MiB) and turns the second
    # matmul into an accumulated reduction over the hidden axis.
    if hidden % 128 == 0 and hidden > block_h:
        th = block_h
        while hidden % th != 0:
            th -= 128
    else:
        th = hidden  # full extent (always legal per BlockSpec rules)

    grid = (m_pad // tm, hidden // th)

    out = pl.pallas_call(
        _ffn_kernel,
        out_shape=jax.ShapeDtypeStruct((m_pad, dim), x.dtype),
        grid=grid,
        in_specs=[
            pl.BlockSpec((tm, dim), lambda i, j: (i, 0)),   # x rows (re-used over j)
            pl.BlockSpec((dim, th), lambda i, j: (0, j)),   # W1^T hidden block
            pl.BlockSpec((1, th), lambda i, j: (0, j)),     # b1 hidden block
            pl.BlockSpec((th, dim), lambda i, j: (j, 0)),   # W2^T hidden block
            pl.BlockSpec((1, dim), lambda i, j: (0, 0)),    # b2
        ],
        out_specs=pl.BlockSpec((tm, dim), lambda i, j: (i, 0)),
        scratch_shapes=[pltpu.VMEM((tm, dim), jnp.float32)],
        compiler_params=pltpu.CompilerParams(
            dimension_semantics=("parallel", "arbitrary")),
    )(x2, w1_t, b1.reshape(1, hidden), w2_t, b2.reshape(1, dim))

    return out[:m].reshape(orig_shape)


def feedforward_reference(x, w1, b1, w2, b2):
    """Pure-JAX replica of the PyTorch forward (weights in PyTorch layout)."""
    h = x @ w1.T + b1
    h = jax.nn.gelu(h, approximate=False)   # nn.GELU() default (exact erf)
    return h @ w2.T + b2


if __name__ == "__main__":
    # Small shapes consistent with the module: batch=2, seq=8, dim=32, hidden=256.
    B, N, DIM, HIDDEN = 2, 8, 32, 256

    key = jax.random.PRNGKey(0)
    kx, kw1, kb1, kw2, kb2 = jax.random.split(key, 5)

    x = jax.random.normal(kx, (B, N, DIM), dtype=jnp.float32)
    # Deterministic Linear-like fan-in init, PyTorch layout: W1 (hidden, dim), W2 (dim, hidden).
    w1 = jax.random.uniform(kw1, (HIDDEN, DIM), jnp.float32,
                            -1.0 / np.sqrt(DIM), 1.0 / np.sqrt(DIM))
    b1 = jax.random.uniform(kb1, (HIDDEN,), jnp.float32,
                            -1.0 / np.sqrt(DIM), 1.0 / np.sqrt(DIM))
    w2 = jax.random.uniform(kw2, (DIM, HIDDEN), jnp.float32,
                            -1.0 / np.sqrt(HIDDEN), 1.0 / np.sqrt(HIDDEN))
    b2 = jax.random.uniform(kb2, (DIM,), jnp.float32,
                            -1.0 / np.sqrt(HIDDEN), 1.0 / np.sqrt(HIDDEN))

    # Transpose once, outside the per-call hot path (kernel consumes x @ W^T layout).
    w1_t = jnp.asarray(w1.T)   # (DIM, HIDDEN)
    w2_t = jnp.asarray(w2.T)   # (HIDDEN, DIM)

    # block_h=128 so the demo exercises the hidden-axis accumulation (2 steps).
    y = feedforward_forward(x, w1_t, b1, w2_t, b2, block_m=256, block_h=128)
    y = jax.block_until_ready(y)

    y_ref = feedforward_reference(x, w1, b1, w2, b2)
    np.testing.assert_allclose(np.asarray(y), np.asarray(y_ref), atol=1e-2, rtol=1e-2)

    print("KERNEL_OK")
</pallas_src>

<mosaic_0001>
module attributes {stable_mosaic.version = 11 : i64} {
  func.func @_ffn_kernel(%arg0: i32, %arg1: i32, %arg2: memref<16x32xf32, #tpu.memory_space<vmem>>, %arg3: memref<32x128xf32, #tpu.memory_space<vmem>>, %arg4: memref<1x128xf32, #tpu.memory_space<vmem>>, %arg5: memref<128x32xf32, #tpu.memory_space<vmem>>, %arg6: memref<1x32xf32, #tpu.memory_space<vmem>>, %arg7: memref<16x32xf32, #tpu.memory_space<vmem>>, %arg8: memref<16x32xf32, #tpu.memory_space<vmem>>) attributes {dimension_semantics = [#tpu.dimension_semantics<parallel>, #tpu.dimension_semantics<arbitrary>], iteration_bounds = array<i64: 1, 2>, scalar_prefetch = 0 : i64, scratch_operands = 1 : i64, tpu.core_type = #tpu.core_type<tc>, window_params = [{transform_indices = @transform_0, window_bounds = array<i64: 16, 32>}, {transform_indices = @transform_1, window_bounds = array<i64: 32, 128>}, {transform_indices = @transform_2, window_bounds = array<i64: 1, 128>}, {transform_indices = @transform_3, window_bounds = array<i64: 128, 32>}, {pipeline_mode = #tpu.pipeline_mode<synchronous>, transform_indices = @transform_4, window_bounds = array<i64: 1, 32>}, {transform_indices = @transform_5, window_bounds = array<i64: 16, 32>}]} {
    %c0_i32 = arith.constant 0 : i32
    %0 = arith.cmpi eq, %arg1, %c0_i32 : i32
    %1 = arith.extui %0 : i1 to i32
    %c0_i32_0 = arith.constant 0 : i32
    %2 = arith.cmpi ne, %1, %c0_i32_0 : i32
    scf.if %2 {
      %cst_29 = arith.constant 0.000000e+00 : f32
      %57 = vector.broadcast %cst_29 : f32 to vector<16x32xf32>
      %c0_30 = arith.constant 0 : index
      %c0_31 = arith.constant 0 : index
      %58 = vector.load %arg8[%c0_30, %c0_31] : memref<16x32xf32, #tpu.memory_space<vmem>>, vector<16x32xf32>
      tpu.vector_store %arg8[%c0_30, %c0_31], %57 {strides = array<i32>} : memref<16x32xf32, #tpu.memory_space<vmem>>, vector<16x32xf32>,
    } else {
    }
    %c0 = arith.constant 0 : index
    %c0_1 = arith.constant 0 : index
    %3 = vector.load %arg2[%c0, %c0_1] : memref<16x32xf32, #tpu.memory_space<vmem>>, vector<16x32xf32>
    %c0_2 = arith.constant 0 : index
    %c0_3 = arith.constant 0 : index
    %4 = vector.load %arg3[%c0_2, %c0_3] : memref<32x128xf32, #tpu.memory_space<vmem>>, vector<32x128xf32>
    %cst = arith.constant dense<0.000000e+00> : vector<16x128xf32>
    %5 = tpu.matmul %3, %4, %cst {dimension_numbers = #tpu.dot_dimension_numbers<[1], [0], [0], [1], [0, 0, 1, 1], [], []>} : vector<16x32xf32>, vector<32x128xf32>, vector<16x128xf32> -> vector<16x128xf32>
    %c0_4 = arith.constant 0 : index
    %c0_5 = arith.constant 0 : index
    %6 = vector.load %arg4[%c0_4, %c0_5] : memref<1x128xf32, #tpu.memory_space<vmem>>, vector<1x128xf32>
    %7 = vector.broadcast %6 : vector<1x128xf32> to vector<16x128xf32>
    %8 = arith.addf %5, %7 : vector<16x128xf32>
    %cst_6 = arith.constant 5.000000e-01 : f32
    %9 = vector.broadcast %cst_6 : f32 to vector<16x128xf32>
    %10 = arith.mulf %9, %8 : vector<16x128xf32>
    %cst_7 = arith.constant 0.707106769 : f32
    %11 = vector.broadcast %cst_7 : f32 to vector<16x128xf32>
    %12 = arith.mulf %8, %11 : vector<16x128xf32>
    %13 = math.absf %12 : vector<16x128xf32>
    %cst_8 = arith.constant 0.327591091 : f32
    %14 = vector.broadcast %cst_8 : f32 to vector<16x128xf32>
    %15 = arith.mulf %14, %13 : vector<16x128xf32>
    %cst_9 = arith.constant 1.000000e+00 : f32
    %16 = vector.broadcast %cst_9 : f32 to vector<16x128xf32>
    %17 = arith.addf %16, %15 : vector<16x128xf32>
    %cst_10 = arith.constant 1.000000e+00 : f32
    %18 = vector.broadcast %cst_10 : f32 to vector<16x128xf32>
    %19 = arith.divf %18, %17 : vector<16x128xf32>
    %cst_11 = arith.constant 1.06140542 : f32
    %20 = vector.broadcast %cst_11 : f32 to vector<16x128xf32>
    %21 = arith.mulf %20, %19 : vector<16x128xf32>
    %cst_12 = arith.constant -1.45315206 : f32
    %22 = vector.broadcast %cst_12 : f32 to vector<16x128xf32>
    %23 = arith.addf %21, %22 : vector<16x128xf32>
    %24 = arith.mulf %23, %19 : vector<16x128xf32>
    %cst_13 = arith.constant 1.42141378 : f32
    %25 = vector.broadcast %cst_13 : f32 to vector<16x128xf32>
    %26 = arith.addf %24, %25 : vector<16x128xf32>
    %27 = arith.mulf %26, %19 : vector<16x128xf32>
    %cst_14 = arith.constant -0.284496725 : f32
    %28 = vector.broadcast %cst_14 : f32 to vector<16x128xf32>
    %29 = arith.addf %27, %28 : vector<16x128xf32>
    %30 = arith.mulf %29, %19 : vector<16x128xf32>
    %cst_15 = arith.constant 0.254829586 : f32
    %31 = vector.broadcast %cst_15 : f32 to vector<16x128xf32>
    %32 = arith.addf %30, %31 : vector<16x128xf32>
    %33 = arith.mulf %32, %19 : vector<16x128xf32>
    %cst_16 = arith.constant 0.000000e+00 : f32
    %34 = vector.broadcast %cst_16 : f32 to vector<16x128xf32>
    %35 = arith.subf %34, %13 : vector<16x128xf32>
    %36 = arith.mulf %35, %13 : vector<16x128xf32>
    %37 = math.exp %36 : vector<16x128xf32>
    %38 = arith.mulf %33, %37 : vector<16x128xf32>
    %cst_17 = arith.constant 1.000000e+00 : f32
    %39 = vector.broadcast %cst_17 : f32 to vector<16x128xf32>
    %40 = arith.subf %39, %38 : vector<16x128xf32>
    %cst_18 = arith.constant 0.000000e+00 : f32
    %41 = vector.broadcast %cst_18 : f32 to vector<16x128xf32>
    %42 = arith.cmpf olt, %12, %41 : vector<16x128xf32>
    %cst_19 = arith.constant 0.000000e+00 : f32
    %43 = vector.broadcast %cst_19 : f32 to vector<16x128xf32>
    %44 = arith.subf %43, %40 : vector<16x128xf32>
    %45 = arith.select %42, %44, %40 : vector<16x128xi1>, vector<16x128xf32>
    %cst_20 = arith.constant 1.000000e+00 : f32
    %46 = vector.broadcast %cst_20 : f32 to vector<16x128xf32>
    %47 = arith.addf %46, %45 : vector<16x128xf32>
    %48 = arith.mulf %10, %47 : vector<16x128xf32>
    %c0_21 = arith.constant 0 : index
    %c0_22 = arith.constant 0 : index
    %49 = vector.load %arg8[%c0_21, %c0_22] : memref<16x32xf32, #tpu.memory_space<vmem>>, vector<16x32xf32>
    %c0_23 = arith.constant 0 : index
    %c0_24 = arith.constant 0 : index
    %50 = vector.load %arg5[%c0_23, %c0_24] : memref<128x32xf32, #tpu.memory_space<vmem>>, vector<128x32xf32>
    %cst_25 = arith.constant dense<0.000000e+00> : vector<16x32xf32>
    %51 = tpu.matmul %48, %50, %cst_25 {dimension_numbers = #tpu.dot_dimension_numbers<[1], [0], [0], [1], [0, 0, 1, 1], [], []>} : vector<16x128xf32>, vector<128x32xf32>, vector<16x32xf32> -> vector<16x32xf32>
    %52 = arith.addf %49, %51 : vector<16x32xf32>
    %c0_26 = arith.constant 0 : index
    %c0_27 = arith.constant 0 : index
    %53 = vector.load %arg8[%c0_26, %c0_27] : memref<16x32xf32, #tpu.memory_space<vmem>>, vector<16x32xf32>
    tpu.vector_store %arg8[%c0_26, %c0_27], %52 {strides = array<i32>} : memref<16x32xf32, #tpu.memory_space<vmem>>, vector<16x32xf32>,
    %c1_i32 = arith.constant 1 : i32
    %54 = arith.cmpi eq, %arg1, %c1_i32 : i32
    %55 = arith.extui %54 : i1 to i32
    %c0_i32_28 = arith.constant 0 : i32
    %56 = arith.cmpi ne, %55, %c0_i32_28 : i32
    scf.if %56 {
      %c0_29 = arith.constant 0 : index
      %c0_30 = arith.constant 0 : index
      %57 = vector.load %arg8[%c0_29, %c0_30] : memref<16x32xf32, #tpu.memory_space<vmem>>, vector<16x32xf32>
      %c0_31 = arith.constant 0 : index
      %c0_32 = arith.constant 0 : index
      %58 = vector.load %arg6[%c0_31, %c0_32] : memref<1x32xf32, #tpu.memory_space<vmem>>, vector<1x32xf32>
      %59 = vector.broadcast %58 : vector<1x32xf32> to vector<16x32xf32>
      %60 = arith.addf %57, %59 : vector<16x32xf32>
      %c0_33 = arith.constant 0 : index
      %c0_34 = arith.constant 0 : index
      %61 = vector.load %arg7[%c0_33, %c0_34] : memref<16x32xf32, #tpu.memory_space<vmem>>, vector<16x32xf32>
      tpu.vector_store %arg7[%c0_33, %c0_34], %60 {strides = array<i32>} : memref<16x32xf32, #tpu.memory_space<vmem>>, vector<16x32xf32>,
    } else {
    }
    return
  }
  func.func @transform_0(%arg0: i32, %arg1: i32) -> (i32, i32) {
    %c0_i32 = arith.constant 0 : i32
    %c0_i32_0 = arith.constant 0 : i32
    return %arg0, %c0_i32 : i32, i32
  }
  func.func @transform_1(%arg0: i32, %arg1: i32) -> (i32, i32) {
    %c0_i32 = arith.constant 0 : i32
    %c0_i32_0 = arith.constant 0 : i32
    return %c0_i32, %arg1 : i32, i32
  }
  func.func @transform_2(%arg0: i32, %arg1: i32) -> (i32, i32) {
    %c0_i32 = arith.constant 0 : i32
    %c0_i32_0 = arith.constant 0 : i32
    return %c0_i32, %arg1 : i32, i32
  }
  func.func @transform_3(%arg0: i32, %arg1: i32) -> (i32, i32) {
    %c0_i32 = arith.constant 0 : i32
    %c0_i32_0 = arith.constant 0 : i32
    return %arg1, %c0_i32 : i32, i32
  }
  func.func @transform_4(%arg0: i32, %arg1: i32) -> (i32, i32) {
    %c0_i32 = arith.constant 0 : i32
    %c0_i32_0 = arith.constant 0 : i32
    %c0_i32_1 = arith.constant 0 : i32
    return %c0_i32, %c0_i32_0 : i32, i32
  }
  func.func @transform_5(%arg0: i32, %arg1: i32) -> (i32, i32) {
    %c0_i32 = arith.constant 0 : i32
    %c0_i32_0 = arith.constant 0 : i32
    return %arg0, %c0_i32 : i32, i32
  }
}

</mosaic_0001>

<llo_original>
// kernel: tpu_custom_call.1
$region0: #{tpu_custom_call.1}
  #allocation0 [shape = 'u32[]', space=smem, size = 0x4, offset = 0x4, fixed_abs, tag = 'smem constant byte address 0x4 - core index']
  #allocation1 [shape = 'u32[144,128]{1,0:T(1,128)}', space=vmem, size = 0x12000, scoped, tag = 'internal scratch']
  #allocation2 [shape = 'f32[16,32]{1,0:T(8,128)}', space=vmem, size = 0x2000, scoped, tag = 'scratch operand']
  %s0 = inlined_call_operand.vmem [shape: f32[16,32], index: 0, kind: input, shape index: {}]
  %s1 = inlined_call_operand.vmem [shape: f32[32,256], index: 1, kind: input, shape index: {}]
  %s2 = inlined_call_operand.vmem [shape: f32[1,256], index: 2, kind: input, shape index: {}]
  %s3 = inlined_call_operand.vmem [shape: f32[256,32], index: 3, kind: input, shape index: {}]
  %s4 = inlined_call_operand.vmem [shape: f32[1,32], index: 4, kind: input, shape index: {}]
  %s5 = inlined_call_operand.hbm [shape: f32[16,32], index: 5, kind: output, shape index: {}]
  %s6 = sld [smem:[#allocation0]]
  $region99: #{tpu_custom_call.1} parent=0
    _
  %s8 = ssub.s32 1, %s6
  %s9 = scalar_select 0, %s8, %s6
  $region1: #{tpu_custom_call.1} parent=0
    #allocation3 [shape = 'u8[32768]{0}', space=vmem, size = 0x8000, scoped, tag = 'input window, operand 1']
    #allocation4 [shape = 'u8[8192]{0}', space=vmem, size = 0x2000, scoped, tag = 'output window, operand 0, single buffered']
    #allocation5 [shape = 's32[2]{0}', space=sflag, size = 0x8, scoped, tag = 'scoped memory for tpu_custom_call.1']
    %10 = vsyncpa [#allocation5], 0
    loop: start=0, step=1, limit=4
    $region2: #{tpu_custom_call.1} parent=1 // loop_pre_header
      _
    $region3: #{tpu_custom_call.1} parent=1 // loop_header
      %s12 = sphi 0, %s16
      %p13 = scmp.ge.s32.totalorder %s12, 4
      %s19 = sphi 0, %s31
      %s20 = sphi 0, %s27
      %s21 = sphi 0, %s19
      %s22 = sphi 0, %s20
      %s23 = sphi 0, %s21
      %s24 = sphi 0, %s22
      %s34 = sphi 0, %s36
      %s37 = sphi 0, %s34
      %s38 = sphi 0, %s37
      %s54 = sphi 0, %s38
      %s60 = sphi 0, %s62
      %s63 = sphi 0, %s60
      %s64 = sphi 0, %s63
      %s80 = sphi 0, %s64
      %s86 = sphi 0, %s88
      %s89 = sphi 0, %s86
      %s90 = sphi 0, %s89
      %s106 = sphi 0, %s90
      %s112 = sphi 0, %s114
      %s115 = sphi 0, %s112
      %s116 = sphi 0, %s115
      %s132 = sphi 0, %s116
      %s136 = sphi 0, %s136
      %s138 = sphi 0, %s136
      %s139 = sphi 0, %s138
      %s153 = sphi 0, %s139
      %s159 = sphi 0, %s161
      %s162 = sphi 0, %s159
      %s163 = sphi 0, %s162
      %s179 = sphi 0, %s163
    $region4: #{tpu_custom_call.1} parent=1 // loop_header_branch
      %15 = sbr.rel (%p13) target = $region8
    $region5: #{tpu_custom_call.1} parent=1 // loop_body
      %s17 = ssub.s32 %s12, 1
      %s18 = ssub.s32 %s12, 2
      %s25 = sadd.s32 1, %s20
      %p26 = scmp.ge.s32.totalorder %s25, 2
      %s27 = scalar_select %p26, 0, %s25
      %s28 = sadd.s32 1, %s19
      %s29 = scalar_select %p26, %s28, %s19
      %p30 = scmp.ge.s32.totalorder %s29, 1
      %s31 = scalar_select %p30, 0, %s29
      %s32 = ssub.s32 %s19, %s31
      %p33 = scmp.eq.s32.totalorder %s32, 0
      %s35 = sadd.s32 %s34, 1
      %s36 = scalar_select %p33, %s34, %s35
      %p39 = pneg %p33
      %p40 = scmp.eq.s32.totalorder %s12, 1
      %p41 = por %p39, %p40
      %p42 = scmp.ne.s32.totalorder %s34, %s37
      %p43 = scmp.eq.s32.totalorder %s12, 0
      %p44 = por %p42, %p43
      %p45 = scmp.ne.s32.totalorder %s34, %s37
      %p46 = scmp.eq.s32.totalorder %s17, 1
      %p47 = por %p45, %p46
      %p48 = scmp.ne.s32.totalorder %s37, %s38
      %p49 = scmp.eq.s32.totalorder %s17, 0
      %p50 = por %p48, %p49
      %p51 = scmp.ne.s32.totalorder %s37, %s38
      %p52 = scmp.eq.s32.totalorder %s18, 1
      %p53 = por %p51, %p52
      %p55 = scmp.ne.s32.totalorder %s38, %s54
      %p56 = scmp.eq.s32.totalorder %s18, 0
      %p57 = por %p55, %p56
      %s58 = ssub.s32 %s20, %s27
      %p59 = scmp.eq.s32.totalorder %s58, 0
      %s61 = sadd.s32 %s60, 1
      %s62 = scalar_select %p59, %s60, %s61
      %p65 = pneg %p59
      %p66 = scmp.eq.s32.totalorder %s12, 1
      %p67 = por %p65, %p66
      %p68 = scmp.ne.s32.totalorder %s60, %s63
      %p69 = scmp.eq.s32.totalorder %s12, 0
      %p70 = por %p68, %p69
      %p71 = scmp.ne.s32.totalorder %s60, %s63
      %p72 = scmp.eq.s32.totalorder %s17, 1
      %p73 = por %p71, %p72
      %p74 = scmp.ne.s32.totalorder %s63, %s64
      %p75 = scmp.eq.s32.totalorder %s17, 0
      %p76 = por %p74, %p75
      %p77 = scmp.ne.s32.totalorder %s63, %s64
      %p78 = scmp.eq.s32.totalorder %s18, 1
      %p79 = por %p77, %p78
      %p81 = scmp.ne.s32.totalorder %s64, %s80
      %p82 = scmp.eq.s32.totalorder %s18, 0
      %p83 = por %p81, %p82
      %s84 = ssub.s32 %s20, %s27
      %p85 = scmp.eq.s32.totalorder %s84, 0
      %s87 = sadd.s32 %s86, 1
      %s88 = scalar_select %p85, %s86, %s87
      %p91 = pneg %p85
      %p92 = scmp.eq.s32.totalorder %s12, 1
      %p93 = por %p91, %p92
      %p94 = scmp.ne.s32.totalorder %s86, %s89
      %p95 = scmp.eq.s32.totalorder %s12, 0
      %p96 = por %p94, %p95
      %p97 = scmp.ne.s32.totalorder %s86, %s89
      %p98 = scmp.eq.s32.totalorder %s17, 1
      %p99 = por %p97, %p98
      %p100 = scmp.ne.s32.totalorder %s89, %s90
      %p101 = scmp.eq.s32.totalorder %s17, 0
      %p102 = por %p100, %p101
      %p103 = scmp.ne.s32.totalorder %s89, %s90
      %p104 = scmp.eq.s32.totalorder %s18, 1
      %p105 = por %p103, %p104
      %p107 = scmp.ne.s32.totalorder %s90, %s106
      %p108 = scmp.eq.s32.totalorder %s18, 0
      %p109 = por %p107, %p108
      %s110 = ssub.s32 %s20, %s27
      %p111 = scmp.eq.s32.totalorder %s110, 0
      %s113 = sadd.s32 %s112, 1
      %s114 = scalar_select %p111, %s112, %s113
      %p117 = pneg %p111
      %p118 = scmp.eq.s32.totalorder %s12, 1
      %p119 = por %p117, %p118
      %p120 = scmp.ne.s32.totalorder %s112, %s115
      %p121 = scmp.eq.s32.totalorder %s12, 0
      %p122 = por %p120, %p121
      %p123 = scmp.ne.s32.totalorder %s112, %s115
      %p124 = scmp.eq.s32.totalorder %s17, 1
      %p125 = por %p123, %p124
      %p126 = scmp.ne.s32.totalorder %s115, %s116
      %p127 = scmp.eq.s32.totalorder %s17, 0
      %p128 = por %p126, %p127
      %p129 = scmp.ne.s32.totalorder %s115, %s116
      %p130 = scmp.eq.s32.totalorder %s18, 1
      %p131 = por %p129, %p130
      %p133 = scmp.ne.s32.totalorder %s116, %s132
      %p134 = scmp.eq.s32.totalorder %s18, 0
      %p135 = por %p133, %p134
      %s137 = sadd.s32 %s136, 1
      %p140 = scmp.eq.s32.totalorder %s12, 1
      %p141 = scmp.ne.s32.totalorder %s136, %s138
      %p142 = scmp.eq.s32.totalorder %s12, 0
      %p143 = por %p141, %p142
      %p144 = scmp.ne.s32.totalorder %s136, %s138
      %p145 = scmp.eq.s32.totalorder %s17, 1
      %p146 = por %p144, %p145
      %p147 = scmp.ne.s32.totalorder %s138, %s139
      %p148 = scmp.eq.s32.totalorder %s17, 0
      %p149 = por %p147, %p148
      %p150 = scmp.ne.s32.totalorder %s138, %s139
      %p151 = scmp.eq.s32.totalorder %s18, 1
      %p152 = por %p150, %p151
      %p154 = scmp.ne.s32.totalorder %s139, %s153
      %p155 = scmp.eq.s32.totalorder %s18, 0
      %p156 = por %p154, %p155
      %s157 = ssub.s32 %s19, %s31
      %p158 = scmp.eq.s32.totalorder %s157, 0
      %s160 = sadd.s32 %s159, 1
      %s161 = scalar_select %p158, %s159, %s160
      %p164 = pneg %p158
      %p165 = scmp.eq.s32.totalorder %s12, 1
      %p166 = por %p164, %p165
      %p167 = scmp.ne.s32.totalorder %s159, %s162
      %p168 = scmp.eq.s32.totalorder %s12, 0
      %p169 = por %p167, %p168
      %p170 = scmp.ne.s32.totalorder %s159, %s162
      %p171 = scmp.eq.s32.totalorder %s17, 1
      %p172 = por %p170, %p171
      %p173 = scmp.ne.s32.totalorder %s162, %s163
      %p174 = scmp.eq.s32.totalorder %s17, 0
      %p175 = por %p173, %p174
      %p176 = scmp.ne.s32.totalorder %s162, %s163
      %p177 = scmp.eq.s32.totalorder %s18, 1
      %p178 = por %p176, %p177
      %p180 = scmp.ne.s32.totalorder %s163, %s179
      %p181 = scmp.eq.s32.totalorder %s18, 0
      %p182 = por %p180, %p181
      %p183 = scmp.le.s32.totalorder 1, %s12
      %p184 = scmp.lt.s32.totalorder %s12, 3
      %p185 = pnand %p183, %p184
      %p186 = pneg %p185
      // Predicated region
      $region9: #{tpu_custom_call.1} parent=5 // pred_check
        _
      $region10: #{tpu_custom_call.1} parent=5 // pred_check_branch
        %188 = sbr.rel (%p185) target = $region12
      $region11: #{tpu_custom_call.1} parent=5 // pred_region
        %s189 = ssub.s32 %s12, 1
        // Predicated region
        $region13: #{tpu_custom_call.1} parent=11 // pred_check
          %p190 = pneg %p50
        $region14: #{tpu_custom_call.1} parent=11 // pred_check_branch
          %192 = sbr.rel (%p190) target = $region16
        $region15: #{tpu_custom_call.1} parent=11 // pred_region
          %s193 = smul.u32 2, %s21
          %p194 = scmp.lt.s32.totalorder %s193, 1
          %s195 = scalar_select %p194, %s193, 1
          %s196 = smul.addr %s195, 8
          %s197 = scalar_lea.vmem %s0, %s196
          %s198 = smul.u32 2, %s21
        $region16: #{tpu_custom_call.1} parent=11 // pred_fallthru
          _
        // Predicated region
        $region17: #{tpu_custom_call.1} parent=11 // pred_check
          %p199 = pneg %p149
        $region18: #{tpu_custom_call.1} parent=11 // pred_check_branch
          %201 = sbr.rel (%p199) target = $region20
        $region19: #{tpu_custom_call.1} parent=11 // pred_region
          _
        $region20: #{tpu_custom_call.1} parent=11 // pred_fallthru
          _
      $region12: #{tpu_custom_call.1} parent=5 // pred_fallthru
        _
      %p202 = scmp.lt.s32.totalorder %s12, 2
      // Predicated region
      $region21: #{tpu_custom_call.1} parent=5 // pred_check
        %p203 = pneg %p202
      $region22: #{tpu_custom_call.1} parent=5 // pred_check_branch
        %205 = sbr.rel (%p203) target = $region24
      $region23: #{tpu_custom_call.1} parent=5 // pred_region
        // Predicated region
        $region25: #{tpu_custom_call.1} parent=23 // pred_check
          %p206 = pneg %p70
        $region26: #{tpu_custom_call.1} parent=23 // pred_check_branch
          %208 = sbr.rel (%p206) target = $region28
        $region27: #{tpu_custom_call.1} parent=23 // pred_region
          %s209 = sand.u32 %s60, 1
          %s210 = sand.u32 %s60, 1
          %s211 = smul.addr %s210, 32
          %s212 = scalar_lea.vmem [#allocation3], %s211
          %s213 = smul.addr %s20, 8
          %s214 = scalar_lea.vmem %s1, %s213
          // Predicated region
          $region29: #{tpu_custom_call.1} parent=27 // pred_check
            _
          $region30: #{tpu_custom_call.1} parent=27 // pred_check_branch
            %216 = sbr.rel (0) target = $region32
          $region31: #{tpu_custom_call.1} parent=27 // pred_region
            // Predicated region
            $region33: #{tpu_custom_call.1} parent=31 // pred_check
              _
            $region34: #{tpu_custom_call.1} parent=31 // pred_check_branch
              %218 = sbr.rel (0) target = $region36
            $region35: #{tpu_custom_call.1} parent=31 // pred_region
              // Predicated region
              $region48: #{tpu_custom_call.1} parent=35 // pred_check
                _
              $region49: #{tpu_custom_call.1} parent=35 // pred_check_branch
                %239 = sbr.rel (0) target = $region51
              $region50: #{tpu_custom_call.1} parent=35 // pred_region
                loop: start=0, step=1, limit=1
                $region52: #{tpu_custom_call.1} parent=50 // loop_pre_header
                  _
                $region53: #{tpu_custom_call.1} parent=50 // loop_header
                  %s241 = sphi 0, %s245
                  %p242 = scmp.ge.s32.totalorder %s241, 1
                  %s246 = sphi %s214, %s214
                  %s247 = sphi %s212, %s212
                $region54: #{tpu_custom_call.1} parent=50 // loop_header_branch
                  %244 = sbr.rel (%p242) target = $region58
                $region55: #{tpu_custom_call.1} parent=50 // loop_body
                  %v248 = vld [vmem:[%s246] sm:$0xff]
                  %249 = vst [vmem:[%s247] sm:$0xff] %v248
                  %v250 = vld [vmem:[%s246 + $0x10] sm:$0xff]
                  %251 = vst [vmem:[%s247 + $0x8] sm:$0xff] %v250
                  %v252 = vld [vmem:[%s246 + $0x20] sm:$0xff]
                  %253 = vst [vmem:[%s247 + $0x10] sm:$0xff] %v252
                  %v254 = vld [vmem:[%s246 + $0x30] sm:$0xff]
                  %255 = vst [vmem:[%s247 + $0x18] sm:$0xff] %v254
                $region56: #{tpu_custom_call.1} parent=50 // loop_footer
                  %s245 = sadd.s32 1, %s241
                $region57: #{tpu_custom_call.1} parent=50 // loop_footer_branch
                  %240 = sbr.rel target = $region53
                $region58: #{tpu_custom_call.1} parent=50 // loop_exit
                  _
              $region51: #{tpu_custom_call.1} parent=35 // pred_fallthru
                _
              // Predicated region
              $region59: #{tpu_custom_call.1} parent=35 // pred_check
                _
              $region60: #{tpu_custom_call.1} parent=35 // pred_check_branch
                %257 = sbr.rel target = $region62
              $region61: #{tpu_custom_call.1} parent=35 // pred_region
                _
              $region62: #{tpu_custom_call.1} parent=35 // pred_fallthru
                _
            $region36: #{tpu_custom_call.1} parent=31 // pred_fallthru
              _
            // Predicated region
            $region37: #{tpu_custom_call.1} parent=31 // pred_check
              _
            $region38: #{tpu_custom_call.1} parent=31 // pred_check_branch
              %220 = sbr.rel target = $region40
            $region39: #{tpu_custom_call.1} parent=31 // pred_region
              loop: start=0, step=1, limit=1
              $region41: #{tpu_custom_call.1} parent=39 // loop_pre_header
                _
              $region42: #{tpu_custom_call.1} parent=39 // loop_header
                %s223 = sphi 0, %s227
                %p224 = scmp.ge.s32.totalorder %s223, 1
                %s228 = sphi %s214, %s214
                %s229 = sphi %s212, %s212
              $region43: #{tpu_custom_call.1} parent=39 // loop_header_branch
                %226 = sbr.rel (%p224) target = $region47
              $region44: #{tpu_custom_call.1} parent=39 // loop_body
                %v230 = vld [vmem:[%s228] sm:$0xff]
                %231 = vst [vmem:[%s229] sm:$0xff] %v230
                %v232 = vld [vmem:[%s228 + $0x10] sm:$0xff]
                %233 = vst [vmem:[%s229 + $0x8] sm:$0xff] %v232
                %v234 = vld [vmem:[%s228 + $0x20] sm:$0xff]
                %235 = vst [vmem:[%s229 + $0x10] sm:$0xff] %v234
                %v236 = vld [vmem:[%s228 + $0x30] sm:$0xff]
                %237 = vst [vmem:[%s229 + $0x18] sm:$0xff] %v236
              $region45: #{tpu_custom_call.1} parent=39 // loop_footer
                %s227 = sadd.s32 1, %s223
              $region46: #{tpu_custom_call.1} parent=39 // loop_footer_branch
                %222 = sbr.rel target = $region42
              $region47: #{tpu_custom_call.1} parent=39 // loop_exit
                _
            $region40: #{tpu_custom_call.1} parent=31 // pred_fallthru
              _
          $region32: #{tpu_custom_call.1} parent=27 // pred_fallthru
            _
          %258 = vnop
        $region28: #{tpu_custom_call.1} parent=23 // pred_fallthru
          _
        // Predicated region
        $region63: #{tpu_custom_call.1} parent=23 // pred_check
          %p259 = pneg %p96
        $region64: #{tpu_custom_call.1} parent=23 // pred_check_branch
          %261 = sbr.rel (%p259) target = $region66
        $region65: #{tpu_custom_call.1} parent=23 // pred_region
          %p262 = scmp.lt.s32.totalorder %s20, 1
          %s263 = scalar_select %p262, %s20, 1
          %s264 = scalar_lea.vmem %s2, %s263
        $region66: #{tpu_custom_call.1} parent=23 // pred_fallthru
          _
        // Predicated region
        $region67: #{tpu_custom_call.1} parent=23 // pred_check
          %p265 = pneg %p122
        $region68: #{tpu_custom_call.1} parent=23 // pred_check_branch
          %267 = sbr.rel (%p265) target = $region70
        $region69: #{tpu_custom_call.1} parent=23 // pred_region
          %s268 = smul.u32 16, %s20
          %p269 = scmp.lt.s32.totalorder %s268, 31
          %s270 = scalar_select %p269, %s268, 31
          %s271 = smul.addr %s270, 8
          %s272 = scalar_lea.vmem %s3, %s271
          %s273 = smul.u32 16, %s20
        $region70: #{tpu_custom_call.1} parent=23 // pred_fallthru
          _
      $region24: #{tpu_custom_call.1} parent=5 // pred_fallthru
        _
      %p274 = scmp.le.s32.totalorder 1, %s12
      %p275 = scmp.lt.s32.totalorder %s12, 3
      %p276 = pnand %p274, %p275
      %p277 = pneg %p276
      // Predicated region
      $region71: #{tpu_custom_call.1} parent=5 // pred_check
        _
      $region72: #{tpu_custom_call.1} parent=5 // pred_check_branch
        %279 = sbr.rel (%p276) target = $region74
      $region73: #{tpu_custom_call.1} parent=5 // pred_region
        %s280 = ssub.s32 %s12, 1
        %s281 = sand.u32 %s63, 1
        %s282 = sand.u32 %s63, 1
        %s283 = smul.addr %s282, 32
        %s284 = scalar_lea.vmem [#allocation3], %s283
        // Predicated region
        $region75: #{tpu_custom_call.1} parent=73 // pred_check
          %p285 = pneg %p76
        $region76: #{tpu_custom_call.1} parent=73 // pred_check_branch
          %287 = sbr.rel (%p285) target = $region78
        $region77: #{tpu_custom_call.1} parent=73 // pred_region
          _
        $region78: #{tpu_custom_call.1} parent=73 // pred_fallthru
          _
        %s288 = smul.u32 2, %s21
        %p289 = scmp.lt.s32.totalorder %s288, 1
        %s290 = scalar_select %p289, %s288, 1
        %s291 = smul.addr %s290, 8
        %s292 = scalar_lea.vmem %s0, %s291
        %p293 = pneg %p50
        %p294 = pneg %p47
        %s295 = sand.u32 %s63, 1
        %s296 = sand.u32 %s63, 1
        %s297 = smul.addr %s296, 32
        %s298 = scalar_lea.vmem [#allocation3], %s297
        %p299 = pneg %p76
        %p300 = pneg %p73
        %p301 = scmp.lt.s32.totalorder %s22, 1
        %s302 = scalar_select %p301, %s22, 1
        %s303 = scalar_lea.vmem %s2, %s302
        %p304 = pneg %p102
        %p305 = pneg %p99
        %s306 = smul.u32 16, %s22
        %p307 = scmp.lt.s32.totalorder %s306, 31
        %s308 = scalar_select %p307, %s306, 31
        %s309 = smul.addr %s308, 8
        %s310 = scalar_lea.vmem %s3, %s309
        %p311 = pneg %p128
        %p312 = pneg %p125
        %p313 = pneg %p149
        %p314 = pneg %p146
        %p315 = pneg %p175
        %p316 = pneg %p172
        %s317 = smul.u32 2, %s21
        %p318 = scmp.lt.s32.totalorder %s317, 1
        %s319 = scalar_select %p318, %s317, 1
        %s320 = smul.addr %s319, 8
        %s321 = scalar_lea.vmem %s0, %s320
        %s322 = smul.u32 2, %s21
        %p323 = scmp.lt.s32.totalorder %s22, 1
        %s324 = scalar_select %p323, %s22, 1
        %s325 = scalar_lea.vmem %s2, %s324
        %s326 = smul.u32 16, %s22
        %p327 = scmp.lt.s32.totalorder %s326, 31
        %s328 = scalar_select %p327, %s326, 31
        %s329 = smul.addr %s328, 8
        %s330 = scalar_lea.vmem %s3, %s329
        %s331 = smul.u32 16, %s22
        %s332 = smul.u32 2, %s21
        %p333 = scmp.eq.s32.totalorder %s22, 0
        // Predicated region
        $region79: #{tpu_custom_call.1} parent=73 // pred_check
          %p334 = pneg %p333
        $region80: #{tpu_custom_call.1} parent=73 // pred_check_branch
          %336 = sbr.rel (%p334) target = $region82
        $region81: #{tpu_custom_call.1} parent=73 // pred_region
          %vm337 = vcmask 261120
          %338 = vst.msk [vmem:[#allocation2] sm:$0xff] %vm337, 0.0
          %339 = vst.msk [vmem:[#allocation2 + $0x8] sm:$0xff] %vm337, 0.0
        $region82: #{tpu_custom_call.1} parent=73 // pred_fallthru
          _
        %v340 = vld [vmem:[%s321] sm:$0xff]
        %v341 = vld [vmem:[%s321 + $0x8] sm:$0xff]
        %v342 = vld [vmem:[%s284] sm:$0xff]
        %v343 = vld [vmem:[%s284 + $0x8] sm:$0xff]
        %v344 = vld [vmem:[%s284 + $0x10] sm:$0xff]
        %v345 = vld [vmem:[%s284 + $0x18] sm:$0xff]
        %v346 = vld [vmem:[%s325] sm:$0x1]
        %v348 = vlaneseq
        %v349 = vshrl.u32 %v348, 7
        %v350 = vsub.s32 0, %v349
        %v351 = vrot.slane %v346, %v350
        %vm353 = vcmask 261120
        %v355 = vsel %vm353, %v340, 0
        %v358 = vsel %vm353, %v341, 0
        %360 = vmatprep.subr.mxu0 0.0
        %361 = vmatpush1.msra.mxu0 %v342
        %362 = vmatprep.subr.mxu0 0.0
        %363 = vmatpush1.msra.mxu0 %v343
        %364 = vmatprep.subr.mxu0 0.0
        %365 = vmatpush1.msra.mxu0 %v344
        %366 = vmatprep.subr.mxu0 0.0
        %367 = vmatpush1.msra.mxu0 %v345
        %368 = vmatprep.subr.mxu0 0.0
        %369 = vmatpush1.msra.mxu0 0.0
        %370 = vmatprep.subr.mxu0 0.0
        %371 = vmatpush1.msra.mxu0 0.0
        %372 = vmatprep.subr.mxu0 0.0
        %373 = vmatpush1.msra.mxu0 0.0
        %374 = vmatprep.subr.mxu0 0.0
        %375 = vmatpush1.msra.mxu0 0.0
        %376 = vmatprep.subr.mxu0 0.0
        %377 = vmatpush1.msra.mxu0 0.0
        %378 = vmatprep.subr.mxu0 0.0
        %379 = vmatpush1.msra.mxu0 0.0
        %380 = vmatprep.subr.mxu0 0.0
        %381 = vmatpush1.msra.mxu0 0.0
        %382 = vmatprep.subr.mxu0 0.0
        %383 = vmatpush1.msra.mxu0 0.0
        %384 = vmatprep.subr.mxu0 0.0
        %385 = vmatpush1.msra.mxu0 0.0
        %386 = vmatprep.subr.mxu0 0.0
        %387 = vmatpush1.msra.mxu0 0.0
        %388 = vmatprep.subr.mxu0 0.0
        %389 = vmatpush1.msra.mxu0 0.0
        %390 = vmatprep.subr.mxu0 0.0
        %391 = vmatpush1.msra.mxu0 0.0
        %392 = vmatprep.subr.mxu0 0.0
        %393 = vmatpush1.msra.mxu0 0.0
        %394 = vmatprep.subr.mxu0 0.0
        %395 = vmatpush1.msra.mxu0 0.0
        %396 = vmatprep.subr.mxu0 0.0
        %397 = vmatpush1.msra.mxu0 0.0
        %398 = vmatprep.subr.mxu0 0.0
        %399 = vmatpush1.msra.mxu0 0.0
        %400 = vmatprep.subr.mxu0 0.0
        %401 = vmatpush1.msra.mxu0 0.0
        %402 = vmatprep.subr.mxu0 0.0
        %403 = vmatpush1.msra.mxu0 0.0
        %404 = vmatprep.subr.mxu0 0.0
        %405 = vmatpush1.msra.mxu0 0.0
        %406 = vmatprep.subr.mxu0 0.0
        %407 = vmatpush1.msra.mxu0 0.0
        %408 = vmatprep.subr.mxu0 0.0
        %409 = vmatpush1.msra.mxu0 0.0
        %410 = vmatprep.subr.mxu0 0.0
        %411 = vmatpush1.msra.mxu0 0.0
        %412 = vmatprep.subr.mxu0 0.0
        %413 = vmatpush1.msra.mxu0 0.0
        %414 = vmatprep.subr.mxu0 0.0
        %415 = vmatpush1.msra.mxu0 0.0
        %416 = vmatprep.subr.mxu0 0.0
        %417 = vmatpush1.msra.mxu0 0.0
        %418 = vmatprep.subr.mxu0 0.0
        %419 = vmatpush1.msra.mxu0 0.0
        %420 = vmatprep.subr.mxu0 0.0
        %421 = vmatpush1.msra.mxu0 0.0
        %422 = vmatprep.subr.mxu0 0.0
        %423 = vmatpush1.msra.mxu0 0.0
        %424 = vmatprep.mubr.f32.mxu0 0.0
        %425 = vmatmul.mubr.f32.gmra.mrb[0].mxu0 %v355
        %v426 = vpop.f32.mrb[0].mxu0
        %v427 = vadd.f32 %v351, %v426
        %v428 = vpop.f32.mrb[0].mxu0
        %429 = vmatprep.mubr.f32.mxu0 0.0
        %430 = vmatmul.mubr.f32.gmra.mrb[0].mxu0 %v358
        %v431 = vpop.f32.mrb[0].mxu0
        %v432 = vadd.f32 %v351, %v431
        %v433 = vpop.f32.mrb[0].mxu0
        %434 = vdwg.mxu0
        %v435 = vmul.f32 %v427, 0.5
        %v436 = vmul.f32 %v432, 0.5
        %v437 = vmul.f32 %v427, 0.70710677
        %v438 = vmul.f32 %v432, 0.70710677
        %v439 = vand.u32 2147483647, %v437
        %v440 = vand.u32 2147483647, %v438
        %v441 = vmul.f32 %v439, 0.3275911
        %v442 = vmul.f32 %v440, 0.3275911
        %v443 = vadd.f32 %v441, 1.0
        %v444 = vadd.f32 %v442, 1.0
        %v445 = vrcp.pop %v443
        %v446 = vmul.f32 1.0, %v445
        %v447 = vrcp.pop %v444
        %v448 = vmul.f32 1.0, %v447
        %v449 = vmul.f32 %v446, 1.0614054
        %v450 = vmul.f32 %v448, 1.0614054
        %v451 = vadd.f32 %v449, -1.4531521
        %v452 = vadd.f32 %v450, -1.4531521
        %v453 = vmul.f32 %v451, %v446
        %v454 = vmul.f32 %v452, %v448
        %v455 = vadd.f32 %v453, 1.4214138
        %v456 = vadd.f32 %v454, 1.4214138
        %v457 = vmul.f32 %v455, %v446
        %v458 = vmul.f32 %v456, %v448
        %v459 = vadd.f32 %v457, -0.28449672
        %v460 = vadd.f32 %v458, -0.28449672
        %v461 = vmul.f32 %v459, %v446
        %v462 = vmul.f32 %v460, %v448
        %v463 = vadd.f32 %v461, 0.2548296
        %v464 = vadd.f32 %v462, 0.2548296
        %v465 = vmul.f32 %v463, %v446
        %v466 = vmul.f32 %v464, %v448
        %v467 = vsub.f32 0.0, %v439
        %v468 = vsub.f32 0.0, %v440
        %v469 = vmul.f32 %v467, %v439
        %v470 = vmul.f32 %v468, %v440
        %v471 = vmul.f32 %v469, 1.442695
        %v472 = vpow.pop %v471
        %v473 = vmul.f32 %v470, 1.442695
        %v474 = vpow.pop %v473
        %v475 = vmul.f32 %v465, %v472
        %v476 = vmul.f32 %v466, %v474
        %v477 = vsub.f32 1.0, %v475
        %v478 = vsub.f32 1.0, %v476
        %vm479 = vcmp.lt.f32.partialorder %v437, 0.0
        %vm480 = vcmp.lt.f32.partialorder %v438, 0.0
        %v481 = vsub.f32 0.0, %v477
        %v482 = vsub.f32 0.0, %v478
        %v483 = vsel %vm479, %v481, %v477
        %v484 = vsel %vm480, %v482, %v478
        %v485 = vadd.f32 %v483, 1.0
        %v486 = vadd.f32 %v484, 1.0
        %v487 = vmul.f32 %v435, %v485
        %v488 = vmul.f32 %v436, %v486
        %v489 = vld [vmem:[#allocation2] sm:$0xff]
        %v490 = vld [vmem:[#allocation2 + $0x8] sm:$0xff]
        %v491 = vld [vmem:[%s330] sm:$0xff]
        %v492 = vld [vmem:[%s330 + $0x8] sm:$0xff]
        %v493 = vld [vmem:[%s330 + $0x10] sm:$0xff]
        %v494 = vld [vmem:[%s330 + $0x18] sm:$0xff]
        %v495 = vld [vmem:[%s330 + $0x20] sm:$0xff]
        %v496 = vld [vmem:[%s330 + $0x28] sm:$0xff]
        %v497 = vld [vmem:[%s330 + $0x30] sm:$0xff]
        %v498 = vld [vmem:[%s330 + $0x38] sm:$0xff]
        %v499 = vld [vmem:[%s330 + $0x40] sm:$0xff]
        %v500 = vld [vmem:[%s330 + $0x48] sm:$0xff]
        %v501 = vld [vmem:[%s330 + $0x50] sm:$0xff]
        %v502 = vld [vmem:[%s330 + $0x58] sm:$0xff]
        %v503 = vld [vmem:[%s330 + $0x60] sm:$0xff]
        %v504 = vld [vmem:[%s330 + $0x68] sm:$0xff]
        %v505 = vld [vmem:[%s330 + $0x70] sm:$0xff]
        %v506 = vld [vmem:[%s330 + $0x78] sm:$0xff]
        %507 = vmatprep.subr.mxu0 0.0
        %508 = vmatpush1.msra.mxu0 %v491
        %509 = vmatprep.subr.mxu0 0.0
        %510 = vmatpush1.msra.mxu0 %v492
        %511 = vmatprep.subr.mxu0 0.0
        %512 = vmatpush1.msra.mxu0 %v493
        %513 = vmatprep.subr.mxu0 0.0
        %514 = vmatpush1.msra.mxu0 %v494
        %515 = vmatprep.subr.mxu0 0.0
        %516 = vmatpush1.msra.mxu0 %v495
        %517 = vmatprep.subr.mxu0 0.0
        %518 = vmatpush1.msra.mxu0 %v496
        %519 = vmatprep.subr.mxu0 0.0
        %520 = vmatpush1.msra.mxu0 %v497
        %521 = vmatprep.subr.mxu0 0.0
        %522 = vmatpush1.msra.mxu0 %v498
        %523 = vmatprep.subr.mxu0 0.0
        %524 = vmatpush1.msra.mxu0 %v499
        %525 = vmatprep.subr.mxu0 0.0
        %526 = vmatpush1.msra.mxu0 %v500
        %527 = vmatprep.subr.mxu0 0.0
        %528 = vmatpush1.msra.mxu0 %v501
        %529 = vmatprep.subr.mxu0 0.0
        %530 = vmatpush1.msra.mxu0 %v502
        %531 = vmatprep.subr.mxu0 0.0
        %532 = vmatpush1.msra.mxu0 %v503
        %533 = vmatprep.subr.mxu0 0.0
        %534 = vmatpush1.msra.mxu0 %v504
        %535 = vmatprep.subr.mxu0 0.0
        %536 = vmatpush1.msra.mxu0 %v505
        %537 = vmatprep.subr.mxu0 0.0
        %538 = vmatpush1.msra.mxu0 %v506
        %539 = vmatprep.subr.mxu0 0.0
        %540 = vmatpush1.msra.mxu0 0.0
        %541 = vmatprep.subr.mxu0 0.0
        %542 = vmatpush1.msra.mxu0 0.0
        %543 = vmatprep.subr.mxu0 0.0
        %544 = vmatpush1.msra.mxu0 0.0
        %545 = vmatprep.subr.mxu0 0.0
        %546 = vmatpush1.msra.mxu0 0.0
        %547 = vmatprep.subr.mxu0 0.0
        %548 = vmatpush1.msra.mxu0 0.0
        %549 = vmatprep.subr.mxu0 0.0
        %550 = vmatpush1.msra.mxu0 0.0
        %551 = vmatprep.subr.mxu0 0.0
        %552 = vmatpush1.msra.mxu0 0.0
        %553 = vmatprep.subr.mxu0 0.0
        %554 = vmatpush1.msra.mxu0 0.0
        %555 = vmatprep.subr.mxu0 0.0
        %556 = vmatpush1.msra.mxu0 0.0
        %557 = vmatprep.subr.mxu0 0.0
        %558 = vmatpush1.msra.mxu0 0.0
        %559 = vmatprep.subr.mxu0 0.0
        %560 = vmatpush1.msra.mxu0 0.0
        %561 = vmatprep.subr.mxu0 0.0
        %562 = vmatpush1.msra.mxu0 0.0
        %563 = vmatprep.subr.mxu0 0.0
        %564 = vmatpush1.msra.mxu0 0.0
        %565 = vmatprep.subr.mxu0 0.0
        %566 = vmatpush1.msra.mxu0 0.0
        %567 = vmatprep.subr.mxu0 0.0
        %568 = vmatpush1.msra.mxu0 0.0
        %569 = vmatprep.subr.mxu0 0.0
        %570 = vmatpush1.msra.mxu0 0.0
        %571 = vmatprep.mubr.f32.mxu0 0.0
        %572 = vmatmul.mubr.f32.gmra.mrb[0].mxu0 %v487
        %v573 = vpop.f32.mrb[0].mxu0
        %v574 = vadd.f32 0.0, %v573
        %v575 = vpop.f32.mrb[0].mxu0
        %576 = vmatprep.mubr.f32.mxu0 0.0
        %577 = vmatmul.mubr.f32.gmra.mrb[0].mxu0 %v488
        %v578 = vpop.f32.mrb[0].mxu0
        %v579 = vadd.f32 0.0, %v578
        %v580 = vpop.f32.mrb[0].mxu0
        %581 = vdwg.mxu0
        %v582 = vadd.f32 %v489, %v574
        %v583 = vadd.f32 %v490, %v579
        %584 = vst.msk [vmem:[#allocation2] sm:$0xff] %vm353, %v582
        %585 = vst.msk [vmem:[#allocation2 + $0x8] sm:$0xff] %vm353, %v583
        %p586 = scmp.eq.s32.totalorder %s22, 1
        // Predicated region
        $region83: #{tpu_custom_call.1} parent=73 // pred_check
          %p587 = pneg %p586
        $region84: #{tpu_custom_call.1} parent=73 // pred_check_branch
          %589 = sbr.rel (%p587) target = $region86
        $region85: #{tpu_custom_call.1} parent=73 // pred_region
          %v590 = vld [vmem:[#allocation2] sm:$0xff]
          %v591 = vld [vmem:[#allocation2 + $0x8] sm:$0xff]
          %v592 = vld [vmem:[%s4] sm:$0x1]
          %v594 = vlaneseq
          %v595 = vshrl.u32 %v594, 7
          %v596 = vsub.s32 0, %v595
          %v597 = vrot.slane %v592, %v596
          %v599 = vadd.f32 %v590, %v597
          %v600 = vadd.f32 %v591, %v597
          %601 = vst.msk [vmem:[#allocation4] sm:$0xff] %vm353, %v599
          %602 = vst.msk [vmem:[#allocation4 + $0x8] sm:$0xff] %vm353, %v600
        $region86: #{tpu_custom_call.1} parent=73 // pred_fallthru
          _
        // Predicated region
        $region87: #{tpu_custom_call.1} parent=73 // pred_check
          %p603 = pneg %p172
        $region88: #{tpu_custom_call.1} parent=73 // pred_check_branch
          %605 = sbr.rel (%p603) target = $region90
        $region89: #{tpu_custom_call.1} parent=73 // pred_region
          %s606 = smul.u32 2, %s21
          %s608 = ssub.s32 256, 256
          %609 = vsyncadd [#allocation5], %s608
          %s610 = smul.addr %s606, 128
          %s611 = scalar_lea.hbm %s5, %s610
          %s612 = sshll.u32 [#allocation4], 4
          %s613 = int_to_ptr.vmem [resolvable:$true] %s612
          %618 = dma.vmem_to_hbm [thread:$0]  %s613, 256, %s611, [#allocation5], 128, 128, 8
        $region90: #{tpu_custom_call.1} parent=73 // pred_fallthru
          _
        // Predicated region
        $region91: #{tpu_custom_call.1} parent=73 // pred_check
          %p619 = pneg %p172
        $region92: #{tpu_custom_call.1} parent=73 // pred_check_branch
          %621 = sbr.rel (%p619) target = $region94
        $region93: #{tpu_custom_call.1} parent=73 // pred_region
          %622 = dma.done [#allocation5], 256
        $region94: #{tpu_custom_call.1} parent=73 // pred_fallthru
          _
      $region74: #{tpu_custom_call.1} parent=5 // pred_fallthru
        _
      %p623 = scmp.le.s32.totalorder 2, %s12
      // Predicated region
      $region95: #{tpu_custom_call.1} parent=5 // pred_check
        %p624 = pneg %p623
      $region96: #{tpu_custom_call.1} parent=5 // pred_check_branch
        %626 = sbr.rel (%p624) target = $region98
      $region97: #{tpu_custom_call.1} parent=5 // pred_region
        %s627 = ssub.s32 %s12, 2
      $region98: #{tpu_custom_call.1} parent=5 // pred_fallthru
        _
    $region6: #{tpu_custom_call.1} parent=1 // loop_footer
      %s16 = sadd.s32 1, %s12
    $region7: #{tpu_custom_call.1} parent=1 // loop_footer_branch
      %11 = sbr.rel target = $region3
    $region8: #{tpu_custom_call.1} parent=1 // loop_exit
      _
    %628 = vsyncpa [#allocation5], 1
    %s629 = scalar_lea.sflag [#allocation5], 1
    %630 = vsyncpa %s629, 1

</llo_original>
